<compile_context>
chip_gen: v7x
topology: tpu7x:2x2x1
jax: 0.10.0
libtpu: 0.0.40
codegen_flags: <defaults>
</compile_context>

<pallas_src>
from functools import partial

import jax
import jax.numpy as jnp
from jax.experimental import pallas as pl
from jax.experimental.pallas import tpu as pltpu


# ---------------------------------------------------------------------------
# Kernels
# ---------------------------------------------------------------------------

def _ln_epilogue(h, gamma_f32, beta_f32, eps, out_dtype):
    """Single-pass LayerNorm over the last axis of the f32 tile `h`."""
    H = h.shape[-1]
    s1 = jnp.sum(h, axis=-1, keepdims=True)
    s2 = jnp.sum(h * h, axis=-1, keepdims=True)
    mean = s1 * (1.0 / H)
    var = jnp.maximum(s2 * (1.0 / H) - mean * mean, 0.0)  # guard tiny negatives
    inv = jax.lax.rsqrt(var + eps)
    return ((h - mean) * inv * gamma_f32 + beta_f32).astype(out_dtype)


def _output_kernel(x_ref, res_ref, w_ref, b_ref, g_ref, beta_ref, o_ref, *, eps):
    # Resident-W path.
    # x_ref   : (TM, I)  streamed row tile of intermediate activations
    # res_ref : (TM, H)  streamed row tile of the residual stream
    # w_ref   : (I,  H)  dense weight (pre-transposed for x @ W), resident
    # b_ref/g_ref/beta_ref : (1, H) bias / LN gamma / LN beta, resident
    h = jnp.dot(x_ref[...], w_ref[...], preferred_element_type=jnp.float32)
    h = h + b_ref[...].astype(jnp.float32)
    # Dropout: identity in eval mode.
    h = h + res_ref[...].astype(jnp.float32)
    o_ref[...] = _ln_epilogue(h,
                              g_ref[...].astype(jnp.float32),
                              beta_ref[...].astype(jnp.float32),
                              eps, o_ref.dtype)


def _output_kernel_ksplit(x_ref, res_ref, w_ref, b_ref, g_ref, beta_ref,
                          o_ref, acc_ref, *, eps):
    # K-split path: contraction axis (I) is a grid axis; f32 VMEM accumulator.
    k = pl.program_id(1)

    @pl.when(k == 0)
    def _():
        acc_ref[...] = jnp.zeros_like(acc_ref)

    acc_ref[...] += jnp.dot(x_ref[...], w_ref[...],
                            preferred_element_type=jnp.float32)

    @pl.when(k == pl.num_programs(1) - 1)
    def _():
        h = acc_ref[...] + b_ref[...].astype(jnp.float32) \
            + res_ref[...].astype(jnp.float32)
        o_ref[...] = _ln_epilogue(h,
                                  g_ref[...].astype(jnp.float32),
                                  beta_ref[...].astype(jnp.float32),
                                  eps, o_ref.dtype)


# ---------------------------------------------------------------------------
# Footprint / tiling heuristics
# ---------------------------------------------------------------------------

def _vmem_capacity_bytes():
    try:
        info = pltpu.get_tpu_info()
        cap = getattr(info, "vmem_capacity_bytes", None)
        if cap:
            return int(cap)
    except Exception:
        pass
    return 64 << 20  # conservative default (v7x per-TensorCore)


def _min_rows(*itemsizes):
    # Sublane packing minimum: (8,128) f32, (16,128) bf16, (32,128) int8/fp8.
    return max(8, 32 // max(min(itemsizes), 1))


def _resident_footprint(tm, I, H, xi, ri, wi, oi):
    resident = I * H * wi + 3 * H * 4                 # single-buffered W + b/gamma/beta
    streamed = 2 * tm * (I * xi + H * ri + H * oi)    # double-buffered row tiles
    temps = 2 * tm * H * 4                            # f32 matmul result + LN temps
    return resident + streamed + temps


def _pick_tm_resident(M, I, H, xi, ri, wi, oi, budget):
    min_rows = _min_rows(xi, ri, oi)
    if M <= min_rows:
        return M  # tiny problem: one full-extent block
    def fits(tm):
        return _resident_footprint(tm, I, H, xi, ri, wi, oi) <= budget
    cands = [c for c in (2048, 1024, 512, 256, 128, 64, 32, 16, 8)
             if min_rows <= c <= M and fits(c)]
    if not cands:
        return min_rows
    # Prefer a tile that divides M (no masked partial last tile) and gives the
    # grid >= 2 steps so megacore sharding / pipelining have work on both cores.
    for c in cands:
        if M % c == 0 and M // c >= 2:
            return c
    for c in cands:
        if M % c == 0:
            return c
    return cands[0]


def _spec(shape, index_map, mode=None):
    if mode is None:
        return pl.BlockSpec(shape, index_map)
    return pl.BlockSpec(shape, index_map, pipeline_mode=mode)


# ---------------------------------------------------------------------------
# Wrapper
# ---------------------------------------------------------------------------

def output_forward(hidden_state, residual, w, b, gamma, beta,
                   eps=1e-12, tm=None, matmul_dtype=None, stream_buffers=None):
    """hidden_state: (B, S, I), residual: (B, S, H), w: (I, H) -> (B, S, H).

    `w` is the nn.Linear weight already transposed to (intermediate, hidden).
    `matmul_dtype` (e.g. jnp.bfloat16) optionally casts x and W for native MXU
    rate and halved traffic; accumulation and LayerNorm stay in f32.
    `stream_buffers` optionally deepens pipelining of the streamed tiles
    (e.g. 3 on v6e if an xprof trace shows exposed DMA).
    """
    B, S, I = hidden_state.shape
    H = residual.shape[-1]
    M = B * S

    x2d = hidden_state.reshape(M, I)
    r2d = residual.reshape(M, H)
    if matmul_dtype is not None:
        x2d = x2d.astype(matmul_dtype)
        w = w.astype(matmul_dtype)
    b2d = b.reshape(1, H)
    g2d = gamma.reshape(1, H)
    beta2d = beta.reshape(1, H)

    out_dtype = residual.dtype
    xi = x2d.dtype.itemsize
    ri = r2d.dtype.itemsize
    wi = w.dtype.itemsize
    oi = jnp.dtype(out_dtype).itemsize

    cap = _vmem_capacity_bytes()
    budget = int(0.75 * cap)
    min_rows = _min_rows(xi, ri, oi)

    # Advisory cost hint so XLA schedules/overlaps the custom call sensibly.
    cost = pl.CostEstimate(
        flops=2 * M * I * H,
        transcendentals=M,  # one rsqrt per row
        bytes_accessed=(x2d.size * xi + r2d.size * ri + w.size * wi
                        + 3 * H * 4 + M * H * oi),
    )

    resident_fits = _resident_footprint(min(M, min_rows), I, H,
                                        xi, ri, wi, oi) <= budget

    if resident_fits or (I % 128 != 0):
        # ------------------------- resident-W path -------------------------
        if tm is None:
            tm = _pick_tm_resident(M, I, H, xi, ri, wi, oi, budget)
        grid_m = pl.cdiv(M, tm)
        footprint = _resident_footprint(tm, I, H, xi, ri, wi, oi)
        vmem_limit = int(min(int(0.9 * cap),
                             max(footprint + (4 << 20), 16 << 20)))

        def build(single_buffer_resident):
            res_mode = pl.Buffered(1) if single_buffer_resident else None
            stream_mode = (pl.Buffered(stream_buffers)
                           if stream_buffers is not None else None)
            in_specs = [
                _spec((tm, I), lambda i: (i, 0), stream_mode),   # x: streamed
                _spec((tm, H), lambda i: (i, 0), stream_mode),   # residual
                _spec((I, H), lambda i: (0, 0), res_mode),       # W: resident
                _spec((1, H), lambda i: (0, 0), res_mode),       # bias
                _spec((1, H), lambda i: (0, 0), res_mode),       # gamma
                _spec((1, H), lambda i: (0, 0), res_mode),       # beta
            ]
            return pl.pallas_call(
                partial(_output_kernel, eps=eps),
                out_shape=jax.ShapeDtypeStruct((M, H), out_dtype),
                grid=(grid_m,),
                in_specs=in_specs,
                out_specs=_spec((tm, H), lambda i: (i, 0), stream_mode),
                compiler_params=pltpu.CompilerParams(
                    dimension_semantics=("parallel",),
                    vmem_limit_bytes=vmem_limit,
                ),
                cost_estimate=cost,
            )

        try:
            out2d = build(True)(x2d, r2d, w, b2d, g2d, beta2d)
        except Exception:
            # Fallback if pipeline_mode=pl.Buffered(1) is rejected by this jax.
            out2d = build(False)(x2d, r2d, w, b2d, g2d, beta2d)

    else:
        # ----------- K-split path (W too large to keep resident) -----------
        tk = 128
        for c in (2048, 1024, 512, 256, 128):
            if I % c == 0:
                tk = c
                break

        def ksplit_footprint(tm_, tk_):
            return (2 * tm_ * tk_ * xi          # streamed x tiles
                    + 2 * tk_ * H * wi          # streamed W tiles
                    + 2 * tm_ * H * (ri + oi)   # streamed residual / out tiles
                    + tm_ * H * 4               # f32 accumulator
                    + 2 * tm_ * H * 4           # LN temps
                    + 3 * H * 4)

        if tm is None:
            tm = min_rows
            for c in (1024, 512, 256, 128, 64, 32, 16, 8):
                if min_rows <= c <= M and ksplit_footprint(c, tk) <= budget:
                    tm = c
                    break
        while tk > 128 and ksplit_footprint(tm, tk) > budget and I % (tk // 2) == 0:
            tk //= 2

        grid_m = pl.cdiv(M, tm)
        grid_k = I // tk
        vmem_limit = int(min(int(0.9 * cap),
                             max(ksplit_footprint(tm, tk) + (4 << 20), 16 << 20)))

        out2d = pl.pallas_call(
            partial(_output_kernel_ksplit, eps=eps),
            out_shape=jax.ShapeDtypeStruct((M, H), out_dtype),
            grid=(grid_m, grid_k),
            in_specs=[
                pl.BlockSpec((tm, tk), lambda i, k: (i, k)),   # x
                pl.BlockSpec((tm, H), lambda i, k: (i, 0)),    # residual
                pl.BlockSpec((tk, H), lambda i, k: (k, 0)),    # W (streamed over K)
                pl.BlockSpec((1, H), lambda i, k: (0, 0)),     # bias
                pl.BlockSpec((1, H), lambda i, k: (0, 0)),     # gamma
                pl.BlockSpec((1, H), lambda i, k: (0, 0)),     # beta
            ],
            out_specs=pl.BlockSpec((tm, H), lambda i, k: (i, 0)),
            scratch_shapes=[pltpu.VMEM((tm, H), jnp.float32)],
            compiler_params=pltpu.CompilerParams(
                dimension_semantics=("parallel", "arbitrary"),
                vmem_limit_bytes=vmem_limit,
            ),
            cost_estimate=cost,
        )(x2d, r2d, w, b2d, g2d, beta2d)

    return out2d.reshape(B, S, H)


# ---------------------------------------------------------------------------
# Self-test
# ---------------------------------------------------------------------------

if __name__ == "__main__":
    # Small config consistent with the module: hidden=32, intermediate=64.
    batch, seq = 2, 8
    hidden_size = 32
    intermediate_size = 64
    eps = 1e-12

    key = jax.random.PRNGKey(0)
    k1, k2, k3, k4 = jax.random.split(key, 4)

    # Deterministic synthetic parameters (nn.Linear: y = x @ W^T + b); the
    # kernel takes W already transposed to (I, H).
    w = (jax.random.normal(k1, (intermediate_size, hidden_size), jnp.float32)
         * (1.0 / jnp.sqrt(intermediate_size)))
    b = jax.random.normal(k2, (hidden_size,), jnp.float32) * 0.01
    gamma = jnp.ones((hidden_size,), jnp.float32)
    beta = jnp.zeros((hidden_size,), jnp.float32)

    hidden_state = jax.random.normal(k3, (batch, seq, intermediate_size),
                                     jnp.float32)
    residual = jax.random.normal(k4, (batch, seq, hidden_size), jnp.float32)

    out = output_forward(hidden_state, residual, w, b, gamma, beta, eps)
    jax.block_until_ready(out)

    # Cross-check against a plain-JAX reference of the same math.
    ref = hidden_state @ w + b
    ref = residual + ref
    mu = ref.mean(-1, keepdims=True)
    var = ((ref - mu) ** 2).mean(-1, keepdims=True)
    ref = (ref - mu) / jnp.sqrt(var + eps) * gamma + beta
    assert jnp.allclose(out, ref, atol=1e-4, rtol=1e-4), "mismatch vs reference"

    print("KERNEL_OK")
</pallas_src>

<mosaic_0001>
module attributes {stable_mosaic.version = 11 : i64} {
  func.func @_output_kernel(%arg0: i32, %arg1: memref<8x64xf32, #tpu.memory_space<vmem>>, %arg2: memref<8x32xf32, #tpu.memory_space<vmem>>, %arg3: memref<64x32xf32, #tpu.memory_space<vmem>>, %arg4: memref<1x32xf32, #tpu.memory_space<vmem>>, %arg5: memref<1x32xf32, #tpu.memory_space<vmem>>, %arg6: memref<1x32xf32, #tpu.memory_space<vmem>>, %arg7: memref<8x32xf32, #tpu.memory_space<vmem>>) attributes {dimension_semantics = [#tpu.dimension_semantics<parallel>], iteration_bounds = array<i64: 2>, scalar_prefetch = 0 : i64, scratch_operands = 0 : i64, tpu.core_type = #tpu.core_type<tc>, window_params = [{transform_indices = @transform_0, window_bounds = array<i64: 8, 64>}, {transform_indices = @transform_1, window_bounds = array<i64: 8, 32>}, {pipeline_mode = #tpu.pipeline_mode<synchronous>, transform_indices = @transform_2, window_bounds = array<i64: 64, 32>}, {pipeline_mode = #tpu.pipeline_mode<synchronous>, transform_indices = @transform_3, window_bounds = array<i64: 1, 32>}, {pipeline_mode = #tpu.pipeline_mode<synchronous>, transform_indices = @transform_4, window_bounds = array<i64: 1, 32>}, {pipeline_mode = #tpu.pipeline_mode<synchronous>, transform_indices = @transform_5, window_bounds = array<i64: 1, 32>}, {transform_indices = @transform_6, window_bounds = array<i64: 8, 32>}]} {
    %c0 = arith.constant 0 : index
    %c0_0 = arith.constant 0 : index
    %0 = vector.load %arg1[%c0, %c0_0] : memref<8x64xf32, #tpu.memory_space<vmem>>, vector<8x64xf32>
    %c0_1 = arith.constant 0 : index
    %c0_2 = arith.constant 0 : index
    %1 = vector.load %arg3[%c0_1, %c0_2] : memref<64x32xf32, #tpu.memory_space<vmem>>, vector<64x32xf32>
    %cst = arith.constant dense<0.000000e+00> : vector<8x32xf32>
    %2 = tpu.matmul %0, %1, %cst {dimension_numbers = #tpu.dot_dimension_numbers<[1], [0], [0], [1], [0, 0, 1, 1], [], []>} : vector<8x64xf32>, vector<64x32xf32>, vector<8x32xf32> -> vector<8x32xf32>
    %c0_3 = arith.constant 0 : index
    %c0_4 = arith.constant 0 : index
    %3 = vector.load %arg4[%c0_3, %c0_4] : memref<1x32xf32, #tpu.memory_space<vmem>>, vector<1x32xf32>
    %4 = vector.broadcast %3 : vector<1x32xf32> to vector<8x32xf32>
    %5 = arith.addf %2, %4 : vector<8x32xf32>
    %c0_5 = arith.constant 0 : index
    %c0_6 = arith.constant 0 : index
    %6 = vector.load %arg2[%c0_5, %c0_6] : memref<8x32xf32, #tpu.memory_space<vmem>>, vector<8x32xf32>
    %7 = arith.addf %5, %6 : vector<8x32xf32>
    %c0_7 = arith.constant 0 : index
    %c0_8 = arith.constant 0 : index
    %8 = vector.load %arg5[%c0_7, %c0_8] : memref<1x32xf32, #tpu.memory_space<vmem>>, vector<1x32xf32>
    %c0_9 = arith.constant 0 : index
    %c0_10 = arith.constant 0 : index
    %9 = vector.load %arg6[%c0_9, %c0_10] : memref<1x32xf32, #tpu.memory_space<vmem>>, vector<1x32xf32>
    %cst_11 = arith.constant dense<0.000000e+00> : vector<8xf32>
    %10 = vector.multi_reduction <add>, %7, %cst_11 [1] : vector<8x32xf32> to vector<8xf32>
    %11 = vector.shape_cast %10 : vector<8xf32> to vector<8x1xf32>
    %12 = arith.mulf %7, %7 : vector<8x32xf32>
    %cst_12 = arith.constant dense<0.000000e+00> : vector<8xf32>
    %13 = vector.multi_reduction <add>, %12, %cst_12 [1] : vector<8x32xf32> to vector<8xf32>
    %14 = vector.shape_cast %13 : vector<8xf32> to vector<8x1xf32>
    %cst_13 = arith.constant 3.125000e-02 : f32
    %15 = vector.broadcast %cst_13 : f32 to vector<8x1xf32>
    %16 = arith.mulf %11, %15 : vector<8x1xf32>
    %cst_14 = arith.constant 3.125000e-02 : f32
    %17 = vector.broadcast %cst_14 : f32 to vector<8x1xf32>
    %18 = arith.mulf %14, %17 : vector<8x1xf32>
    %19 = arith.mulf %16, %16 : vector<8x1xf32>
    %20 = arith.subf %18, %19 : vector<8x1xf32>
    %cst_15 = arith.constant 0.000000e+00 : f32
    %21 = vector.broadcast %cst_15 : f32 to vector<8x1xf32>
    %22 = arith.maximumf %20, %21 : vector<8x1xf32>
    %cst_16 = arith.constant 9.99999996E-13 : f32
    %23 = vector.broadcast %cst_16 : f32 to vector<8x1xf32>
    %24 = arith.addf %22, %23 : vector<8x1xf32>
    %25 = math.rsqrt %24 : vector<8x1xf32>
    %26 = vector.broadcast %16 : vector<8x1xf32> to vector<8x32xf32>
    %27 = arith.subf %7, %26 : vector<8x32xf32>
    %28 = vector.broadcast %25 : vector<8x1xf32> to vector<8x32xf32>
    %29 = arith.mulf %27, %28 : vector<8x32xf32>
    %30 = vector.broadcast %8 : vector<1x32xf32> to vector<8x32xf32>
    %31 = arith.mulf %29, %30 : vector<8x32xf32>
    %32 = vector.broadcast %9 : vector<1x32xf32> to vector<8x32xf32>
    %33 = arith.addf %31, %32 : vector<8x32xf32>
    %c0_17 = arith.constant 0 : index
    %c0_18 = arith.constant 0 : index
    %34 = vector.load %arg7[%c0_17, %c0_18] : memref<8x32xf32, #tpu.memory_space<vmem>>, vector<8x32xf32>
    tpu.vector_store %arg7[%c0_17, %c0_18], %33 {strides = array<i32>} : memref<8x32xf32, #tpu.memory_space<vmem>>, vector<8x32xf32>,
    return
  }
  func.func @transform_0(%arg0: i32) -> (i32, i32) {
    %c0_i32 = arith.constant 0 : i32
    %c0_i32_0 = arith.constant 0 : i32
    return %arg0, %c0_i32 : i32, i32
  }
  func.func @transform_1(%arg0: i32) -> (i32, i32) {
    %c0_i32 = arith.constant 0 : i32
    %c0_i32_0 = arith.constant 0 : i32
    return %arg0, %c0_i32 : i32, i32
  }
  func.func @transform_2(%arg0: i32) -> (i32, i32) {
    %c0_i32 = arith.constant 0 : i32
    %c0_i32_0 = arith.constant 0 : i32
    %c0_i32_1 = arith.constant 0 : i32
    return %c0_i32, %c0_i32_0 : i32, i32
  }
  func.func @transform_3(%arg0: i32) -> (i32, i32) {
    %c0_i32 = arith.constant 0 : i32
    %c0_i32_0 = arith.constant 0 : i32
    %c0_i32_1 = arith.constant 0 : i32
    return %c0_i32, %c0_i32_0 : i32, i32
  }
  func.func @transform_4(%arg0: i32) -> (i32, i32) {
    %c0_i32 = arith.constant 0 : i32
    %c0_i32_0 = arith.constant 0 : i32
    %c0_i32_1 = arith.constant 0 : i32
    return %c0_i32, %c0_i32_0 : i32, i32
  }
  func.func @transform_5(%arg0: i32) -> (i32, i32) {
    %c0_i32 = arith.constant 0 : i32
    %c0_i32_0 = arith.constant 0 : i32
    %c0_i32_1 = arith.constant 0 : i32
    return %c0_i32, %c0_i32_0 : i32, i32
  }
  func.func @transform_6(%arg0: i32) -> (i32, i32) {
    %c0_i32 = arith.constant 0 : i32
    %c0_i32_0 = arith.constant 0 : i32
    return %arg0, %c0_i32 : i32, i32
  }
}

module attributes {stable_mosaic.version = 11 : i64} {
  func.func @_output_kernel(%arg0: i32, %arg1: memref<8x64xf32, #tpu.memory_space<vmem>>, %arg2: memref<8x32xf32, #tpu.memory_space<vmem>>, %arg3: memref<64x32xf32, #tpu.memory_space<vmem>>, %arg4: memref<1x32xf32, #tpu.memory_space<vmem>>, %arg5: memref<1x32xf32, #tpu.memory_space<vmem>>, %arg6: memref<1x32xf32, #tpu.memory_space<vmem>>, %arg7: memref<8x32xf32, #tpu.memory_space<vmem>>) attributes {dimension_semantics = [#tpu.dimension_semantics<parallel>], iteration_bounds = array<i64: 2>, scalar_prefetch = 0 : i64, scratch_operands = 0 : i64, tpu.core_type = #tpu.core_type<tc>, window_params = [{transform_indices = @transform_0, window_bounds = array<i64: 8, 64>}, {transform_indices = @transform_1, window_bounds = array<i64: 8, 32>}, {pipeline_mode = #tpu.pipeline_mode<synchronous>, transform_indices = @transform_2, window_bounds = array<i64: 64, 32>}, {pipeline_mode = #tpu.pipeline_mode<synchronous>, transform_indices = @transform_3, window_bounds = array<i64: 1, 32>}, {pipeline_mode = #tpu.pipeline_mode<synchronous>, transform_indices = @transform_4, window_bounds = array<i64: 1, 32>}, {pipeline_mode = #tpu.pipeline_mode<synchronous>, transform_indices = @transform_5, window_bounds = array<i64: 1, 32>}, {transform_indices = @transform_6, window_bounds = array<i64: 8, 32>}]} {
    %c0 = arith.constant 0 : index
    %c0_0 = arith.constant 0 : index
    %0 = vector.load %arg1[%c0, %c0_0] : memref<8x64xf32, #tpu.memory_space<vmem>>, vector<8x64xf32>
    %c0_1 = arith.constant 0 : index
    %c0_2 = arith.constant 0 : index
    %1 = vector.load %arg3[%c0_1, %c0_2] : memref<64x32xf32, #tpu.memory_space<vmem>>, vector<64x32xf32>
    %cst = arith.constant dense<0.000000e+00> : vector<8x32xf32>
    %2 = tpu.matmul %0, %1, %cst {dimension_numbers = #tpu.dot_dimension_numbers<[1], [0], [0], [1], [0, 0, 1, 1], [], []>} : vector<8x64xf32>, vector<64x32xf32>, vector<8x32xf32> -> vector<8x32xf32>
    %c0_3 = arith.constant 0 : index
    %c0_4 = arith.constant 0 : index
    %3 = vector.load %arg4[%c0_3, %c0_4] : memref<1x32xf32, #tpu.memory_space<vmem>>, vector<1x32xf32>
    %4 = vector.broadcast %3 : vector<1x32xf32> to vector<8x32xf32>
    %5 = arith.addf %2, %4 : vector<8x32xf32>
    %c0_5 = arith.constant 0 : index
    %c0_6 = arith.constant 0 : index
    %6 = vector.load %arg2[%c0_5, %c0_6] : memref<8x32xf32, #tpu.memory_space<vmem>>, vector<8x32xf32>
    %7 = arith.addf %5, %6 : vector<8x32xf32>
    %c0_7 = arith.constant 0 : index
    %c0_8 = arith.constant 0 : index
    %8 = vector.load %arg5[%c0_7, %c0_8] : memref<1x32xf32, #tpu.memory_space<vmem>>, vector<1x32xf32>
    %c0_9 = arith.constant 0 : index
    %c0_10 = arith.constant 0 : index
    %9 = vector.load %arg6[%c0_9, %c0_10] : memref<1x32xf32, #tpu.memory_space<vmem>>, vector<1x32xf32>
    %cst_11 = arith.constant dense<0.000000e+00> : vector<8xf32>
    %10 = vector.multi_reduction <add>, %7, %cst_11 [1] : vector<8x32xf32> to vector<8xf32>
    %11 = vector.shape_cast %10 : vector<8xf32> to vector<8x1xf32>
    %12 = arith.mulf %7, %7 : vector<8x32xf32>
    %cst_12 = arith.constant dense<0.000000e+00> : vector<8xf32>
    %13 = vector.multi_reduction <add>, %12, %cst_12 [1] : vector<8x32xf32> to vector<8xf32>
    %14 = vector.shape_cast %13 : vector<8xf32> to vector<8x1xf32>
    %cst_13 = arith.constant 3.125000e-02 : f32
    %15 = vector.broadcast %cst_13 : f32 to vector<8x1xf32>
    %16 = arith.mulf %11, %15 : vector<8x1xf32>
    %cst_14 = arith.constant 3.125000e-02 : f32
    %17 = vector.broadcast %cst_14 : f32 to vector<8x1xf32>
    %18 = arith.mulf %14, %17 : vector<8x1xf32>
    %19 = arith.mulf %16, %16 : vector<8x1xf32>
    %20 = arith.subf %18, %19 : vector<8x1xf32>
    %cst_15 = arith.constant 0.000000e+00 : f32
    %21 = vector.broadcast %cst_15 : f32 to vector<8x1xf32>
    %22 = arith.maximumf %20, %21 : vector<8x1xf32>
    %cst_16 = arith.constant 9.99999996E-13 : f32
    %23 = vector.broadcast %cst_16 : f32 to vector<8x1xf32>
    %24 = arith.addf %22, %23 : vector<8x1xf32>
    %25 = math.rsqrt %24 : vector<8x1xf32>
    %26 = vector.broadcast %16 : vector<8x1xf32> to vector<8x32xf32>
    %27 = arith.subf %7, %26 : vector<8x32xf32>
    %28 = vector.broadcast %25 : vector<8x1xf32> to vector<8x32xf32>
    %29 = arith.mulf %27, %28 : vector<8x32xf32>
    %30 = vector.broadcast %8 : vector<1x32xf32> to vector<8x32xf32>
    %31 = arith.mulf %29, %30 : vector<8x32xf32>
    %32 = vector.broadcast %9 : vector<1x32xf32> to vector<8x32xf32>
    %33 = arith.addf %31, %32 : vector<8x32xf32>
    %c0_17 = arith.constant 0 : index
    %c0_18 = arith.constant 0 : index
    %34 = vector.load %arg7[%c0_17, %c0_18] : memref<8x32xf32, #tpu.memory_space<vmem>>, vector<8x32xf32>
    tpu.vector_store %arg7[%c0_17, %c0_18], %33 {strides = array<i32>} : memref<8x32xf32, #tpu.memory_space<vmem>>, vector<8x32xf32>,
    return
  }
  func.func @transform_0(%arg0: i32) -> (i32, i32) {
    %c0_i32 = arith.constant 0 : i32
    %c0_i32_0 = arith.constant 0 : i32
    return %arg0, %c0_i32 : i32, i32
  }
  func.func @transform_1(%arg0: i32) -> (i32, i32) {
    %c0_i32 = arith.constant 0 : i32
    %c0_i32_0 = arith.constant 0 : i32
    return %arg0, %c0_i32 : i32, i32
  }
  func.func @transform_2(%arg0: i32) -> (i32, i32) {
    %c0_i32 = arith.constant 0 : i32
    %c0_i32_0 = arith.constant 0 : i32
    %c0_i32_1 = arith.constant 0 : i32
    return %c0_i32, %c0_i32_0 : i32, i32
  }
  func.func @transform_3(%arg0: i32) -> (i32, i32) {
    %c0_i32 = arith.constant 0 : i32
    %c0_i32_0 = arith.constant 0 : i32
    %c0_i32_1 = arith.constant 0 : i32
    return %c0_i32, %c0_i32_0 : i32, i32
  }
  func.func @transform_4(%arg0: i32) -> (i32, i32) {
    %c0_i32 = arith.constant 0 : i32
    %c0_i32_0 = arith.constant 0 : i32
    %c0_i32_1 = arith.constant 0 : i32
    return %c0_i32, %c0_i32_0 : i32, i32
  }
  func.func @transform_5(%arg0: i32) -> (i32, i32) {
    %c0_i32 = arith.constant 0 : i32
    %c0_i32_0 = arith.constant 0 : i32
    %c0_i32_1 = arith.constant 0 : i32
    return %c0_i32, %c0_i32_0 : i32, i32
  }
  func.func @transform_6(%arg0: i32) -> (i32, i32) {
    %c0_i32 = arith.constant 0 : i32
    %c0_i32_0 = arith.constant 0 : i32
    return %arg0, %c0_i32 : i32, i32
  }
}

</mosaic_0001>

<llo_original>
// kernel: tpu_custom_call.1
$region0: #{tpu_custom_call.1}
  #allocation0 [shape = 'u32[]', space=smem, size = 0x4, offset = 0x4, fixed_abs, tag = 'smem constant byte address 0x4 - core index']
  #allocation1 [shape = 'u32[144,128]{1,0:T(1,128)}', space=vmem, size = 0x12000, scoped, tag = 'internal scratch']
  %s0 = inlined_call_operand.vmem [shape: f32[16,64], index: 0, kind: input, shape index: {}]
  %s1 = inlined_call_operand.vmem [shape: f32[16,32], index: 1, kind: input, shape index: {}]
  %s2 = inlined_call_operand.vmem [shape: f32[64,32], index: 2, kind: input, shape index: {}]
  %s3 = inlined_call_operand.vmem [shape: f32[1,32], index: 3, kind: input, shape index: {}]
  %s4 = inlined_call_operand.vmem [shape: f32[1,32], index: 4, kind: input, shape index: {}]
  %s5 = inlined_call_operand.vmem [shape: f32[1,32], index: 5, kind: input, shape index: {}]
  %s6 = inlined_call_operand.hbm [shape: f32[16,32], index: 6, kind: output, shape index: {}]
  %s7 = sld [smem:[#allocation0]]
  $region57: #{tpu_custom_call.1} parent=0
    _
  %s9 = ssub.s32 1, %s7
  %s10 = scalar_select 0, %s9, %s7
  $region1: #{tpu_custom_call.1} parent=0
    #allocation2 [shape = 'u8[8192]{0}', space=vmem, size = 0x2000, scoped, tag = 'output window, operand 0']
    #allocation3 [shape = 's32[2]{0}', space=sflag, size = 0x8, scoped, tag = 'scoped memory for tpu_custom_call.1']
    %11 = vsyncpa [#allocation3], 0
    %s12 = scalar_lea.sflag [#allocation3], 1
    %13 = vsyncpa %s12, 0
    loop: start=0, step=1, limit=4
    $region2: #{tpu_custom_call.1} parent=1 // loop_pre_header
      _
    $region3: #{tpu_custom_call.1} parent=1 // loop_header
      %s15 = sphi 0, %s19
      %p16 = scmp.ge.s32.totalorder %s15, 4
      %s25 = sphi 0, %s27
      %s28 = sphi 0, %s25
      %s29 = sphi 0, %s28
      %s45 = sphi 0, %s29
      %s51 = sphi 0, %s53
      %s54 = sphi 0, %s51
      %s55 = sphi 0, %s54
      %s71 = sphi 0, %s55
      %s75 = sphi 0, %s75
      %s77 = sphi 0, %s75
      %s78 = sphi 0, %s77
      %s92 = sphi 0, %s78
      %s96 = sphi 0, %s96
      %s98 = sphi 0, %s96
      %s99 = sphi 0, %s98
      %s113 = sphi 0, %s99
      %s117 = sphi 0, %s117
      %s119 = sphi 0, %s117
      %s120 = sphi 0, %s119
      %s134 = sphi 0, %s120
      %s138 = sphi 0, %s138
      %s140 = sphi 0, %s138
      %s141 = sphi 0, %s140
      %s155 = sphi 0, %s141
      %s161 = sphi 0, %s163
      %s164 = sphi 0, %s161
      %s165 = sphi 0, %s164
      %s181 = sphi 0, %s165
    $region4: #{tpu_custom_call.1} parent=1 // loop_header_branch
      %18 = sbr.rel (%p16) target = $region8
    $region5: #{tpu_custom_call.1} parent=1 // loop_body
      %s20 = ssub.s32 %s15, 1
      %s21 = ssub.s32 %s15, 2
      %s22 = sadd.s32 %s15, 1
      %s23 = ssub.s32 %s15, %s22
      %p24 = scmp.eq.s32.totalorder %s23, 0
      %s26 = sadd.s32 %s25, 1
      %s27 = scalar_select %p24, %s25, %s26
      %p30 = pneg %p24
      %p31 = scmp.eq.s32.totalorder %s15, 1
      %p32 = por %p30, %p31
      %p33 = scmp.ne.s32.totalorder %s25, %s28
      %p34 = scmp.eq.s32.totalorder %s15, 0
      %p35 = por %p33, %p34
      %p36 = scmp.ne.s32.totalorder %s25, %s28
      %p37 = scmp.eq.s32.totalorder %s20, 1
      %p38 = por %p36, %p37
      %p39 = scmp.ne.s32.totalorder %s28, %s29
      %p40 = scmp.eq.s32.totalorder %s20, 0
      %p41 = por %p39, %p40
      %p42 = scmp.ne.s32.totalorder %s28, %s29
      %p43 = scmp.eq.s32.totalorder %s21, 1
      %p44 = por %p42, %p43
      %p46 = scmp.ne.s32.totalorder %s29, %s45
      %p47 = scmp.eq.s32.totalorder %s21, 0
      %p48 = por %p46, %p47
      %s49 = ssub.s32 %s15, %s22
      %p50 = scmp.eq.s32.totalorder %s49, 0
      %s52 = sadd.s32 %s51, 1
      %s53 = scalar_select %p50, %s51, %s52
      %p56 = pneg %p50
      %p57 = scmp.eq.s32.totalorder %s15, 1
      %p58 = por %p56, %p57
      %p59 = scmp.ne.s32.totalorder %s51, %s54
      %p60 = scmp.eq.s32.totalorder %s15, 0
      %p61 = por %p59, %p60
      %p62 = scmp.ne.s32.totalorder %s51, %s54
      %p63 = scmp.eq.s32.totalorder %s20, 1
      %p64 = por %p62, %p63
      %p65 = scmp.ne.s32.totalorder %s54, %s55
      %p66 = scmp.eq.s32.totalorder %s20, 0
      %p67 = por %p65, %p66
      %p68 = scmp.ne.s32.totalorder %s54, %s55
      %p69 = scmp.eq.s32.totalorder %s21, 1
      %p70 = por %p68, %p69
      %p72 = scmp.ne.s32.totalorder %s55, %s71
      %p73 = scmp.eq.s32.totalorder %s21, 0
      %p74 = por %p72, %p73
      %s76 = sadd.s32 %s75, 1
      %p79 = scmp.eq.s32.totalorder %s15, 1
      %p80 = scmp.ne.s32.totalorder %s75, %s77
      %p81 = scmp.eq.s32.totalorder %s15, 0
      %p82 = por %p80, %p81
      %p83 = scmp.ne.s32.totalorder %s75, %s77
      %p84 = scmp.eq.s32.totalorder %s20, 1
      %p85 = por %p83, %p84
      %p86 = scmp.ne.s32.totalorder %s77, %s78
      %p87 = scmp.eq.s32.totalorder %s20, 0
      %p88 = por %p86, %p87
      %p89 = scmp.ne.s32.totalorder %s77, %s78
      %p90 = scmp.eq.s32.totalorder %s21, 1
      %p91 = por %p89, %p90
      %p93 = scmp.ne.s32.totalorder %s78, %s92
      %p94 = scmp.eq.s32.totalorder %s21, 0
      %p95 = por %p93, %p94
      %s97 = sadd.s32 %s96, 1
      %p100 = scmp.eq.s32.totalorder %s15, 1
      %p101 = scmp.ne.s32.totalorder %s96, %s98
      %p102 = scmp.eq.s32.totalorder %s15, 0
      %p103 = por %p101, %p102
      %p104 = scmp.ne.s32.totalorder %s96, %s98
      %p105 = scmp.eq.s32.totalorder %s20, 1
      %p106 = por %p104, %p105
      %p107 = scmp.ne.s32.totalorder %s98, %s99
      %p108 = scmp.eq.s32.totalorder %s20, 0
      %p109 = por %p107, %p108
      %p110 = scmp.ne.s32.totalorder %s98, %s99
      %p111 = scmp.eq.s32.totalorder %s21, 1
      %p112 = por %p110, %p111
      %p114 = scmp.ne.s32.totalorder %s99, %s113
      %p115 = scmp.eq.s32.totalorder %s21, 0
      %p116 = por %p114, %p115
      %s118 = sadd.s32 %s117, 1
      %p121 = scmp.eq.s32.totalorder %s15, 1
      %p122 = scmp.ne.s32.totalorder %s117, %s119
      %p123 = scmp.eq.s32.totalorder %s15, 0
      %p124 = por %p122, %p123
      %p125 = scmp.ne.s32.totalorder %s117, %s119
      %p126 = scmp.eq.s32.totalorder %s20, 1
      %p127 = por %p125, %p126
      %p128 = scmp.ne.s32.totalorder %s119, %s120
      %p129 = scmp.eq.s32.totalorder %s20, 0
      %p130 = por %p128, %p129
      %p131 = scmp.ne.s32.totalorder %s119, %s120
      %p132 = scmp.eq.s32.totalorder %s21, 1
      %p133 = por %p131, %p132
      %p135 = scmp.ne.s32.totalorder %s120, %s134
      %p136 = scmp.eq.s32.totalorder %s21, 0
      %p137 = por %p135, %p136
      %s139 = sadd.s32 %s138, 1
      %p142 = scmp.eq.s32.totalorder %s15, 1
      %p143 = scmp.ne.s32.totalorder %s138, %s140
      %p144 = scmp.eq.s32.totalorder %s15, 0
      %p145 = por %p143, %p144
      %p146 = scmp.ne.s32.totalorder %s138, %s140
      %p147 = scmp.eq.s32.totalorder %s20, 1
      %p148 = por %p146, %p147
      %p149 = scmp.ne.s32.totalorder %s140, %s141
      %p150 = scmp.eq.s32.totalorder %s20, 0
      %p151 = por %p149, %p150
      %p152 = scmp.ne.s32.totalorder %s140, %s141
      %p153 = scmp.eq.s32.totalorder %s21, 1
      %p154 = por %p152, %p153
      %p156 = scmp.ne.s32.totalorder %s141, %s155
      %p157 = scmp.eq.s32.totalorder %s21, 0
      %p158 = por %p156, %p157
      %s159 = ssub.s32 %s15, %s22
      %p160 = scmp.eq.s32.totalorder %s159, 0
      %s162 = sadd.s32 %s161, 1
      %s163 = scalar_select %p160, %s161, %s162
      %p166 = pneg %p160
      %p167 = scmp.eq.s32.totalorder %s15, 1
      %p168 = por %p166, %p167
      %p169 = scmp.ne.s32.totalorder %s161, %s164
      %p170 = scmp.eq.s32.totalorder %s15, 0
      %p171 = por %p169, %p170
      %p172 = scmp.ne.s32.totalorder %s161, %s164
      %p173 = scmp.eq.s32.totalorder %s20, 1
      %p174 = por %p172, %p173
      %p175 = scmp.ne.s32.totalorder %s164, %s165
      %p176 = scmp.eq.s32.totalorder %s20, 0
      %p177 = por %p175, %p176
      %p178 = scmp.ne.s32.totalorder %s164, %s165
      %p179 = scmp.eq.s32.totalorder %s21, 1
      %p180 = por %p178, %p179
      %p182 = scmp.ne.s32.totalorder %s165, %s181
      %p183 = scmp.eq.s32.totalorder %s21, 0
      %p184 = por %p182, %p183
      %p185 = scmp.le.s32.totalorder 1, %s15
      %p186 = scmp.lt.s32.totalorder %s15, 3
      %p187 = pnand %p185, %p186
      %p188 = pneg %p187
      // Predicated region
      $region9: #{tpu_custom_call.1} parent=5 // pred_check
        _
      $region10: #{tpu_custom_call.1} parent=5 // pred_check_branch
        %190 = sbr.rel (%p187) target = $region12
      $region11: #{tpu_custom_call.1} parent=5 // pred_region
        %s191 = ssub.s32 %s15, 1
        // Predicated region
        $region13: #{tpu_custom_call.1} parent=11 // pred_check
          %p192 = pneg %p88
        $region14: #{tpu_custom_call.1} parent=11 // pred_check_branch
          %194 = sbr.rel (%p192) target = $region16
        $region15: #{tpu_custom_call.1} parent=11 // pred_region
          _
        $region16: #{tpu_custom_call.1} parent=11 // pred_fallthru
          _
        // Predicated region
        $region17: #{tpu_custom_call.1} parent=11 // pred_check
          %p195 = pneg %p109
        $region18: #{tpu_custom_call.1} parent=11 // pred_check_branch
          %197 = sbr.rel (%p195) target = $region20
        $region19: #{tpu_custom_call.1} parent=11 // pred_region
          _
        $region20: #{tpu_custom_call.1} parent=11 // pred_fallthru
          _
        // Predicated region
        $region21: #{tpu_custom_call.1} parent=11 // pred_check
          %p198 = pneg %p130
        $region22: #{tpu_custom_call.1} parent=11 // pred_check_branch
          %200 = sbr.rel (%p198) target = $region24
        $region23: #{tpu_custom_call.1} parent=11 // pred_region
          _
        $region24: #{tpu_custom_call.1} parent=11 // pred_fallthru
          _
        // Predicated region
        $region25: #{tpu_custom_call.1} parent=11 // pred_check
          %p201 = pneg %p151
        $region26: #{tpu_custom_call.1} parent=11 // pred_check_branch
          %203 = sbr.rel (%p201) target = $region28
        $region27: #{tpu_custom_call.1} parent=11 // pred_region
          _
        $region28: #{tpu_custom_call.1} parent=11 // pred_fallthru
          _
      $region12: #{tpu_custom_call.1} parent=5 // pred_fallthru
        _
      %p204 = scmp.lt.s32.totalorder %s15, 2
      // Predicated region
      $region29: #{tpu_custom_call.1} parent=5 // pred_check
        %p205 = pneg %p204
      $region30: #{tpu_custom_call.1} parent=5 // pred_check_branch
        %207 = sbr.rel (%p205) target = $region32
      $region31: #{tpu_custom_call.1} parent=5 // pred_region
        // Predicated region
        $region33: #{tpu_custom_call.1} parent=31 // pred_check
          %p208 = pneg %p35
        $region34: #{tpu_custom_call.1} parent=31 // pred_check_branch
          %210 = sbr.rel (%p208) target = $region36
        $region35: #{tpu_custom_call.1} parent=31 // pred_region
          %p211 = scmp.lt.s32.totalorder %s15, 1
          %s212 = scalar_select %p211, %s15, 1
          %s213 = smul.addr %s212, 8
          %s214 = scalar_lea.vmem %s0, %s213
        $region36: #{tpu_custom_call.1} parent=31 // pred_fallthru
          _
        // Predicated region
        $region37: #{tpu_custom_call.1} parent=31 // pred_check
          %p215 = pneg %p61
        $region38: #{tpu_custom_call.1} parent=31 // pred_check_branch
          %217 = sbr.rel (%p215) target = $region40
        $region39: #{tpu_custom_call.1} parent=31 // pred_region
          %p218 = scmp.lt.s32.totalorder %s15, 1
          %s219 = scalar_select %p218, %s15, 1
          %s220 = smul.addr %s219, 8
          %s221 = scalar_lea.vmem %s1, %s220
        $region40: #{tpu_custom_call.1} parent=31 // pred_fallthru
          _
      $region32: #{tpu_custom_call.1} parent=5 // pred_fallthru
        _
      %p222 = scmp.le.s32.totalorder 1, %s15
      %p223 = scmp.lt.s32.totalorder %s15, 3
      %p224 = pnand %p222, %p223
      %p225 = pneg %p224
      // Predicated region
      $region41: #{tpu_custom_call.1} parent=5 // pred_check
        _
      $region42: #{tpu_custom_call.1} parent=5 // pred_check_branch
        %227 = sbr.rel (%p224) target = $region44
      $region43: #{tpu_custom_call.1} parent=5 // pred_region
        %s228 = ssub.s32 %s15, 1
        %p229 = scmp.lt.s32.totalorder %s20, 1
        %s230 = scalar_select %p229, %s20, 1
        %s231 = smul.addr %s230, 8
        %s232 = scalar_lea.vmem %s0, %s231
        %p233 = pneg %p41
        %p234 = pneg %p38
        %p235 = scmp.lt.s32.totalorder %s20, 1
        %s236 = scalar_select %p235, %s20, 1
        %s237 = smul.addr %s236, 8
        %s238 = scalar_lea.vmem %s1, %s237
        %p239 = pneg %p67
        %p240 = pneg %p64
        %p241 = pneg %p88
        %p242 = pneg %p85
        %p243 = pneg %p109
        %p244 = pneg %p106
        %p245 = pneg %p130
        %p246 = pneg %p127
        %p247 = pneg %p151
        %p248 = pneg %p148
        %p249 = pneg %p177
        %p250 = pneg %p174
        %s251 = sand.u32 %s164, 1
        %s252 = scalar_lea.sflag [#allocation3], %s251
        %s253 = sand.u32 %s164, 1
        %s254 = smul.addr %s253, 8
        %s255 = scalar_lea.vmem [#allocation2], %s254
        %p256 = scmp.lt.s32.totalorder %s20, 1
        %s257 = scalar_select %p256, %s20, 1
        %s258 = smul.addr %s257, 8
        %s259 = scalar_lea.vmem %s0, %s258
        %p260 = scmp.lt.s32.totalorder %s20, 1
        %s261 = scalar_select %p260, %s20, 1
        %s262 = smul.addr %s261, 8
        %s263 = scalar_lea.vmem %s1, %s262
        %v264 = vld [vmem:[%s259] sm:$0xff]
        %v265 = vld [vmem:[%s2] sm:$0xff]
        %v266 = vld [vmem:[%s2 + $0x8] sm:$0xff]
        %v267 = vld [vmem:[%s2 + $0x10] sm:$0xff]
        %v268 = vld [vmem:[%s2 + $0x18] sm:$0xff]
        %v269 = vld [vmem:[%s2 + $0x20] sm:$0xff]
        %v270 = vld [vmem:[%s2 + $0x28] sm:$0xff]
        %v271 = vld [vmem:[%s2 + $0x30] sm:$0xff]
        %v272 = vld [vmem:[%s2 + $0x38] sm:$0xff]
        %v273 = vld [vmem:[%s3] sm:$0x1]
        %v275 = vlaneseq
        %v276 = vshrl.u32 %v275, 7
        %v277 = vsub.s32 0, %v276
        %v278 = vrot.slane %v273, %v277
        %vm280 = vcmask 523264
        %v282 = vsel %vm280, %v264, 0
        %284 = vmatprep.subr.mxu0 0.0
        %285 = vmatpush1.msra.mxu0 %v265
        %286 = vmatprep.subr.mxu0 0.0
        %287 = vmatpush1.msra.mxu0 %v266
        %288 = vmatprep.subr.mxu0 0.0
        %289 = vmatpush1.msra.mxu0 %v267
        %290 = vmatprep.subr.mxu0 0.0
        %291 = vmatpush1.msra.mxu0 %v268
        %292 = vmatprep.subr.mxu0 0.0
        %293 = vmatpush1.msra.mxu0 %v269
        %294 = vmatprep.subr.mxu0 0.0
        %295 = vmatpush1.msra.mxu0 %v270
        %296 = vmatprep.subr.mxu0 0.0
        %297 = vmatpush1.msra.mxu0 %v271
        %298 = vmatprep.subr.mxu0 0.0
        %299 = vmatpush1.msra.mxu0 %v272
        %300 = vmatprep.subr.mxu0 0.0
        %301 = vmatpush1.msra.mxu0 0.0
        %302 = vmatprep.subr.mxu0 0.0
        %303 = vmatpush1.msra.mxu0 0.0
        %304 = vmatprep.subr.mxu0 0.0
        %305 = vmatpush1.msra.mxu0 0.0
        %306 = vmatprep.subr.mxu0 0.0
        %307 = vmatpush1.msra.mxu0 0.0
        %308 = vmatprep.subr.mxu0 0.0
        %309 = vmatpush1.msra.mxu0 0.0
        %310 = vmatprep.subr.mxu0 0.0
        %311 = vmatpush1.msra.mxu0 0.0
        %312 = vmatprep.subr.mxu0 0.0
        %313 = vmatpush1.msra.mxu0 0.0
        %314 = vmatprep.subr.mxu0 0.0
        %315 = vmatpush1.msra.mxu0 0.0
        %316 = vmatprep.subr.mxu0 0.0
        %317 = vmatpush1.msra.mxu0 0.0
        %318 = vmatprep.subr.mxu0 0.0
        %319 = vmatpush1.msra.mxu0 0.0
        %320 = vmatprep.subr.mxu0 0.0
        %321 = vmatpush1.msra.mxu0 0.0
        %322 = vmatprep.subr.mxu0 0.0
        %323 = vmatpush1.msra.mxu0 0.0
        %324 = vmatprep.subr.mxu0 0.0
        %325 = vmatpush1.msra.mxu0 0.0
        %326 = vmatprep.subr.mxu0 0.0
        %327 = vmatpush1.msra.mxu0 0.0
        %328 = vmatprep.subr.mxu0 0.0
        %329 = vmatpush1.msra.mxu0 0.0
        %330 = vmatprep.subr.mxu0 0.0
        %331 = vmatpush1.msra.mxu0 0.0
        %332 = vmatprep.subr.mxu0 0.0
        %333 = vmatpush1.msra.mxu0 0.0
        %334 = vmatprep.subr.mxu0 0.0
        %335 = vmatpush1.msra.mxu0 0.0
        %336 = vmatprep.subr.mxu0 0.0
        %337 = vmatpush1.msra.mxu0 0.0
        %338 = vmatprep.subr.mxu0 0.0
        %339 = vmatpush1.msra.mxu0 0.0
        %340 = vmatprep.subr.mxu0 0.0
        %341 = vmatpush1.msra.mxu0 0.0
        %342 = vmatprep.subr.mxu0 0.0
        %343 = vmatpush1.msra.mxu0 0.0
        %344 = vmatprep.subr.mxu0 0.0
        %345 = vmatpush1.msra.mxu0 0.0
        %346 = vmatprep.subr.mxu0 0.0
        %347 = vmatpush1.msra.mxu0 0.0
        %348 = vmatprep.mubr.f32.mxu0 0.0
        %349 = vmatmul.mubr.f32.gmra.mrb[0].mxu0 %v282
        %v350 = vpop.f32.mrb[0].mxu0
        %v351 = vadd.f32 %v278, %v350
        %v352 = vpop.f32.mrb[0].mxu0
        %353 = vdwg.mxu0
        %v354 = vld [vmem:[%s263] sm:$0xff]
        %v355 = vadd.f32 %v351, %v354
        %v356 = vld [vmem:[%s4] sm:$0x1]
        %v357 = vld [vmem:[%s5] sm:$0x1]
        %vm358 = vcmask 261120
        %v359 = vsel %vm358, %v355, 0.0
        %360 = vadd.xlane.f32.xlu0 %v359
        %v361 = vpop.xlane.xlu0 %360
        %v362 = vmul.f32 %v355, %v355
        %v363 = vsel %vm358, %v362, 0.0
        %364 = vadd.xlane.f32.xlu0 %v363
        %v365 = vpop.xlane.xlu0 %364
        %v366 = vmul.f32 %v361, 0.03125
        %v367 = vmul.f32 %v365, 0.03125
        %v368 = vmul.f32 %v366, %v366
        %v369 = vsub.f32 %v367, %v368
        %v370 = vmax.f32 %v369, 0.0
        %v371 = vadd.f32 %v370, 1e-12
        %v372 = vrsqrt.pop %v371
        %v373 = vsub.f32 %v355, %v366
        %v374 = vmul.f32 %v373, %v372
        %v376 = vlaneseq
        %v377 = vshrl.u32 %v376, 7
        %v378 = vsub.s32 0, %v377
        %v379 = vrot.slane %v356, %v378
        %v381 = vmul.f32 %v374, %v379
        %v383 = vlaneseq
        %v384 = vshrl.u32 %v383, 7
        %v385 = vsub.s32 0, %v384
        %v386 = vrot.slane %v357, %v385
        %v388 = vadd.f32 %v381, %v386
        %389 = vst.msk [vmem:[%s255] sm:$0xff] %vm358, %v388
        %s390 = sand.u32 %s164, 1
        %s391 = scalar_lea.sflag [#allocation3], %s390
        %s392 = sand.u32 %s164, 1
        %s393 = smul.addr %s392, 8
        %s394 = scalar_lea.vmem [#allocation2], %s393
        // Predicated region
        $region45: #{tpu_custom_call.1} parent=43 // pred_check
          %p395 = pneg %p174
        $region46: #{tpu_custom_call.1} parent=43 // pred_check_branch
          %397 = sbr.rel (%p395) target = $region48
        $region47: #{tpu_custom_call.1} parent=43 // pred_region
          %s399 = ssub.s32 128, 128
          %400 = vsyncadd %s391, %s399
          %s401 = smul.addr %s20, 128
          %s402 = scalar_lea.hbm %s6, %s401
          %s404 = sshll.u32 %s394, 4
          %s405 = int_to_ptr.vmem [resolvable:$true] %s404
          %407 = dma.vmem_to_hbm [thread:$0]  %s405, 128, %s402, %s391
        $region48: #{tpu_custom_call.1} parent=43 // pred_fallthru
          _
      $region44: #{tpu_custom_call.1} parent=5 // pred_fallthru
        _
      %p408 = scmp.le.s32.totalorder 2, %s15
      // Predicated region
      $region49: #{tpu_custom_call.1} parent=5 // pred_check
        %p409 = pneg %p408
      $region50: #{tpu_custom_call.1} parent=5 // pred_check_branch
        %411 = sbr.rel (%p409) target = $region52
      $region51: #{tpu_custom_call.1} parent=5 // pred_region
        %s412 = ssub.s32 %s15, 2
        // Predicated region
        $region53: #{tpu_custom_call.1} parent=51 // pred_check
          %p413 = pneg %p180
        $region54: #{tpu_custom_call.1} parent=51 // pred_check_branch
          %415 = sbr.rel (%p413) target = $region56
        $region55: #{tpu_custom_call.1} parent=51 // pred_region
          %s416 = sand.u32 %s165, 1
          %s417 = scalar_lea.sflag [#allocation3], %s416
          %s418 = sand.u32 %s165, 1
          %s419 = smul.addr %s418, 8
          %s420 = scalar_lea.vmem [#allocation2], %s419
          %421 = dma.done %s417, 128
        $region56: #{tpu_custom_call.1} parent=51 // pred_fallthru
          _
      $region52: #{tpu_custom_call.1} parent=5 // pred_fallthru
        _
    $region6: #{tpu_custom_call.1} parent=1 // loop_footer
      %s19 = sadd.s32 1, %s15
    $region7: #{tpu_custom_call.1} parent=1 // loop_footer_branch
      %14 = sbr.rel target = $region3
    $region8: #{tpu_custom_call.1} parent=1 // loop_exit
      _
    %422 = vsyncpa [#allocation3], 1
    %s423 = scalar_lea.sflag [#allocation3], 1
    %424 = vsyncpa %s423, 1

// kernel: tpu_custom_call.1
$region0: #{tpu_custom_call.1}
  #allocation0 [shape = 'u32[]', space=smem, size = 0x4, offset = 0x4, fixed_abs, tag = 'smem constant byte address 0x4 - core index']
  #allocation1 [shape = 'u32[144,128]{1,0:T(1,128)}', space=vmem, size = 0x12000, scoped, tag = 'internal scratch']
  %s0 = inlined_call_operand.vmem [shape: f32[16,64], index: 0, kind: input, shape index: {}]
  %s1 = inlined_call_operand.vmem [shape: f32[16,32], index: 1, kind: input, shape index: {}]
  %s2 = inlined_call_operand.vmem [shape: f32[64,32], index: 2, kind: input, shape index: {}]
  %s3 = inlined_call_operand.vmem [shape: f32[1,32], index: 3, kind: input, shape index: {}]
  %s4 = inlined_call_operand.vmem [shape: f32[1,32], index: 4, kind: input, shape index: {}]
  %s5 = inlined_call_operand.vmem [shape: f32[1,32], index: 5, kind: input, shape index: {}]
  %s6 = inlined_call_operand.hbm [shape: f32[16,32], index: 6, kind: output, shape index: {}]
  %s7 = sld [smem:[#allocation0]]
  $region57: #{tpu_custom_call.1} parent=0
    _
  %s9 = ssub.s32 1, %s7
  %s10 = scalar_select 0, %s9, %s7
  $region1: #{tpu_custom_call.1} parent=0
    #allocation2 [shape = 'u8[8192]{0}', space=vmem, size = 0x2000, scoped, tag = 'output window, operand 0']
    #allocation3 [shape = 's32[2]{0}', space=sflag, size = 0x8, scoped, tag = 'scoped memory for tpu_custom_call.1']
    %11 = vsyncpa [#allocation3], 0
    %s12 = scalar_lea.sflag [#allocation3], 1
    %13 = vsyncpa %s12, 0
    loop: start=0, step=1, limit=4
    $region2: #{tpu_custom_call.1} parent=1 // loop_pre_header
      _
    $region3: #{tpu_custom_call.1} parent=1 // loop_header
      %s15 = sphi 0, %s19
      %p16 = scmp.ge.s32.totalorder %s15, 4
      %s25 = sphi 0, %s27
      %s28 = sphi 0, %s25
      %s29 = sphi 0, %s28
      %s45 = sphi 0, %s29
      %s51 = sphi 0, %s53
      %s54 = sphi 0, %s51
      %s55 = sphi 0, %s54
      %s71 = sphi 0, %s55
      %s75 = sphi 0, %s75
      %s77 = sphi 0, %s75
      %s78 = sphi 0, %s77
      %s92 = sphi 0, %s78
      %s96 = sphi 0, %s96
      %s98 = sphi 0, %s96
      %s99 = sphi 0, %s98
      %s113 = sphi 0, %s99
      %s117 = sphi 0, %s117
      %s119 = sphi 0, %s117
      %s120 = sphi 0, %s119
      %s134 = sphi 0, %s120
      %s138 = sphi 0, %s138
      %s140 = sphi 0, %s138
      %s141 = sphi 0, %s140
      %s155 = sphi 0, %s141
      %s161 = sphi 0, %s163
      %s164 = sphi 0, %s161
      %s165 = sphi 0, %s164
      %s181 = sphi 0, %s165
    $region4: #{tpu_custom_call.1} parent=1 // loop_header_branch
      %18 = sbr.rel (%p16) target = $region8
    $region5: #{tpu_custom_call.1} parent=1 // loop_body
      %s20 = ssub.s32 %s15, 1
      %s21 = ssub.s32 %s15, 2
      %s22 = sadd.s32 %s15, 1
      %s23 = ssub.s32 %s15, %s22
      %p24 = scmp.eq.s32.totalorder %s23, 0
      %s26 = sadd.s32 %s25, 1
      %s27 = scalar_select %p24, %s25, %s26
      %p30 = pneg %p24
      %p31 = scmp.eq.s32.totalorder %s15, 1
      %p32 = por %p30, %p31
      %p33 = scmp.ne.s32.totalorder %s25, %s28
      %p34 = scmp.eq.s32.totalorder %s15, 0
      %p35 = por %p33, %p34
      %p36 = scmp.ne.s32.totalorder %s25, %s28
      %p37 = scmp.eq.s32.totalorder %s20, 1
      %p38 = por %p36, %p37
      %p39 = scmp.ne.s32.totalorder %s28, %s29
      %p40 = scmp.eq.s32.totalorder %s20, 0
      %p41 = por %p39, %p40
      %p42 = scmp.ne.s32.totalorder %s28, %s29
      %p43 = scmp.eq.s32.totalorder %s21, 1
      %p44 = por %p42, %p43
      %p46 = scmp.ne.s32.totalorder %s29, %s45
      %p47 = scmp.eq.s32.totalorder %s21, 0
      %p48 = por %p46, %p47
      %s49 = ssub.s32 %s15, %s22
      %p50 = scmp.eq.s32.totalorder %s49, 0
      %s52 = sadd.s32 %s51, 1
      %s53 = scalar_select %p50, %s51, %s52
      %p56 = pneg %p50
      %p57 = scmp.eq.s32.totalorder %s15, 1
      %p58 = por %p56, %p57
      %p59 = scmp.ne.s32.totalorder %s51, %s54
      %p60 = scmp.eq.s32.totalorder %s15, 0
      %p61 = por %p59, %p60
      %p62 = scmp.ne.s32.totalorder %s51, %s54
      %p63 = scmp.eq.s32.totalorder %s20, 1
      %p64 = por %p62, %p63
      %p65 = scmp.ne.s32.totalorder %s54, %s55
      %p66 = scmp.eq.s32.totalorder %s20, 0
      %p67 = por %p65, %p66
      %p68 = scmp.ne.s32.totalorder %s54, %s55
      %p69 = scmp.eq.s32.totalorder %s21, 1
      %p70 = por %p68, %p69
      %p72 = scmp.ne.s32.totalorder %s55, %s71
      %p73 = scmp.eq.s32.totalorder %s21, 0
      %p74 = por %p72, %p73
      %s76 = sadd.s32 %s75, 1
      %p79 = scmp.eq.s32.totalorder %s15, 1
      %p80 = scmp.ne.s32.totalorder %s75, %s77
      %p81 = scmp.eq.s32.totalorder %s15, 0
      %p82 = por %p80, %p81
      %p83 = scmp.ne.s32.totalorder %s75, %s77
      %p84 = scmp.eq.s32.totalorder %s20, 1
      %p85 = por %p83, %p84
      %p86 = scmp.ne.s32.totalorder %s77, %s78
      %p87 = scmp.eq.s32.totalorder %s20, 0
      %p88 = por %p86, %p87
      %p89 = scmp.ne.s32.totalorder %s77, %s78
      %p90 = scmp.eq.s32.totalorder %s21, 1
      %p91 = por %p89, %p90
      %p93 = scmp.ne.s32.totalorder %s78, %s92
      %p94 = scmp.eq.s32.totalorder %s21, 0
      %p95 = por %p93, %p94
      %s97 = sadd.s32 %s96, 1
      %p100 = scmp.eq.s32.totalorder %s15, 1
      %p101 = scmp.ne.s32.totalorder %s96, %s98
      %p102 = scmp.eq.s32.totalorder %s15, 0
      %p103 = por %p101, %p102
      %p104 = scmp.ne.s32.totalorder %s96, %s98
      %p105 = scmp.eq.s32.totalorder %s20, 1
      %p106 = por %p104, %p105
      %p107 = scmp.ne.s32.totalorder %s98, %s99
      %p108 = scmp.eq.s32.totalorder %s20, 0
      %p109 = por %p107, %p108
      %p110 = scmp.ne.s32.totalorder %s98, %s99
      %p111 = scmp.eq.s32.totalorder %s21, 1
      %p112 = por %p110, %p111
      %p114 = scmp.ne.s32.totalorder %s99, %s113
      %p115 = scmp.eq.s32.totalorder %s21, 0
      %p116 = por %p114, %p115
      %s118 = sadd.s32 %s117, 1
      %p121 = scmp.eq.s32.totalorder %s15, 1
      %p122 = scmp.ne.s32.totalorder %s117, %s119
      %p123 = scmp.eq.s32.totalorder %s15, 0
      %p124 = por %p122, %p123
      %p125 = scmp.ne.s32.totalorder %s117, %s119
      %p126 = scmp.eq.s32.totalorder %s20, 1
      %p127 = por %p125, %p126
      %p128 = scmp.ne.s32.totalorder %s119, %s120
      %p129 = scmp.eq.s32.totalorder %s20, 0
      %p130 = por %p128, %p129
      %p131 = scmp.ne.s32.totalorder %s119, %s120
      %p132 = scmp.eq.s32.totalorder %s21, 1
      %p133 = por %p131, %p132
      %p135 = scmp.ne.s32.totalorder %s120, %s134
      %p136 = scmp.eq.s32.totalorder %s21, 0
      %p137 = por %p135, %p136
      %s139 = sadd.s32 %s138, 1
      %p142 = scmp.eq.s32.totalorder %s15, 1
      %p143 = scmp.ne.s32.totalorder %s138, %s140
      %p144 = scmp.eq.s32.totalorder %s15, 0
      %p145 = por %p143, %p144
      %p146 = scmp.ne.s32.totalorder %s138, %s140
      %p147 = scmp.eq.s32.totalorder %s20, 1
      %p148 = por %p146, %p147
      %p149 = scmp.ne.s32.totalorder %s140, %s141
      %p150 = scmp.eq.s32.totalorder %s20, 0
      %p151 = por %p149, %p150
      %p152 = scmp.ne.s32.totalorder %s140, %s141
      %p153 = scmp.eq.s32.totalorder %s21, 1
      %p154 = por %p152, %p153
      %p156 = scmp.ne.s32.totalorder %s141, %s155
      %p157 = scmp.eq.s32.totalorder %s21, 0
      %p158 = por %p156, %p157
      %s159 = ssub.s32 %s15, %s22
      %p160 = scmp.eq.s32.totalorder %s159, 0
      %s162 = sadd.s32 %s161, 1
      %s163 = scalar_select %p160, %s161, %s162
      %p166 = pneg %p160
      %p167 = scmp.eq.s32.totalorder %s15, 1
      %p168 = por %p166, %p167
      %p169 = scmp.ne.s32.totalorder %s161, %s164
      %p170 = scmp.eq.s32.totalorder %s15, 0
      %p171 = por %p169, %p170
      %p172 = scmp.ne.s32.totalorder %s161, %s164
      %p173 = scmp.eq.s32.totalorder %s20, 1
      %p174 = por %p172, %p173
      %p175 = scmp.ne.s32.totalorder %s164, %s165
      %p176 = scmp.eq.s32.totalorder %s20, 0
      %p177 = por %p175, %p176
      %p178 = scmp.ne.s32.totalorder %s164, %s165
      %p179 = scmp.eq.s32.totalorder %s21, 1
      %p180 = por %p178, %p179
      %p182 = scmp.ne.s32.totalorder %s165, %s181
      %p183 = scmp.eq.s32.totalorder %s21, 0
      %p184 = por %p182, %p183
      %p185 = scmp.le.s32.totalorder 1, %s15
      %p186 = scmp.lt.s32.totalorder %s15, 3
      %p187 = pnand %p185, %p186
      %p188 = pneg %p187
      // Predicated region
      $region9: #{tpu_custom_call.1} parent=5 // pred_check
        _
      $region10: #{tpu_custom_call.1} parent=5 // pred_check_branch
        %190 = sbr.rel (%p187) target = $region12
      $region11: #{tpu_custom_call.1} parent=5 // pred_region
        %s191 = ssub.s32 %s15, 1
        // Predicated region
        $region13: #{tpu_custom_call.1} parent=11 // pred_check
          %p192 = pneg %p88
        $region14: #{tpu_custom_call.1} parent=11 // pred_check_branch
          %194 = sbr.rel (%p192) target = $region16
        $region15: #{tpu_custom_call.1} parent=11 // pred_region
          _
        $region16: #{tpu_custom_call.1} parent=11 // pred_fallthru
          _
        // Predicated region
        $region17: #{tpu_custom_call.1} parent=11 // pred_check
          %p195 = pneg %p109
        $region18: #{tpu_custom_call.1} parent=11 // pred_check_branch
          %197 = sbr.rel (%p195) target = $region20
        $region19: #{tpu_custom_call.1} parent=11 // pred_region
          _
        $region20: #{tpu_custom_call.1} parent=11 // pred_fallthru
          _
        // Predicated region
        $region21: #{tpu_custom_call.1} parent=11 // pred_check
          %p198 = pneg %p130
        $region22: #{tpu_custom_call.1} parent=11 // pred_check_branch
          %200 = sbr.rel (%p198) target = $region24
        $region23: #{tpu_custom_call.1} parent=11 // pred_region
          _
        $region24: #{tpu_custom_call.1} parent=11 // pred_fallthru
          _
        // Predicated region
        $region25: #{tpu_custom_call.1} parent=11 // pred_check
          %p201 = pneg %p151
        $region26: #{tpu_custom_call.1} parent=11 // pred_check_branch
          %203 = sbr.rel (%p201) target = $region28
        $region27: #{tpu_custom_call.1} parent=11 // pred_region
          _
        $region28: #{tpu_custom_call.1} parent=11 // pred_fallthru
          _
      $region12: #{tpu_custom_call.1} parent=5 // pred_fallthru
        _
      %p204 = scmp.lt.s32.totalorder %s15, 2
      // Predicated region
      $region29: #{tpu_custom_call.1} parent=5 // pred_check
        %p205 = pneg %p204
      $region30: #{tpu_custom_call.1} parent=5 // pred_check_branch
        %207 = sbr.rel (%p205) target = $region32
      $region31: #{tpu_custom_call.1} parent=5 // pred_region
        // Predicated region
        $region33: #{tpu_custom_call.1} parent=31 // pred_check
          %p208 = pneg %p35
        $region34: #{tpu_custom_call.1} parent=31 // pred_check_branch
          %210 = sbr.rel (%p208) target = $region36
        $region35: #{tpu_custom_call.1} parent=31 // pred_region
          %p211 = scmp.lt.s32.totalorder %s15, 1
          %s212 = scalar_select %p211, %s15, 1
          %s213 = smul.addr %s212, 8
          %s214 = scalar_lea.vmem %s0, %s213
        $region36: #{tpu_custom_call.1} parent=31 // pred_fallthru
          _
        // Predicated region
        $region37: #{tpu_custom_call.1} parent=31 // pred_check
          %p215 = pneg %p61
        $region38: #{tpu_custom_call.1} parent=31 // pred_check_branch
          %217 = sbr.rel (%p215) target = $region40
        $region39: #{tpu_custom_call.1} parent=31 // pred_region
          %p218 = scmp.lt.s32.totalorder %s15, 1
          %s219 = scalar_select %p218, %s15, 1
          %s220 = smul.addr %s219, 8
          %s221 = scalar_lea.vmem %s1, %s220
        $region40: #{tpu_custom_call.1} parent=31 // pred_fallthru
          _
      $region32: #{tpu_custom_call.1} parent=5 // pred_fallthru
        _
      %p222 = scmp.le.s32.totalorder 1, %s15
      %p223 = scmp.lt.s32.totalorder %s15, 3
      %p224 = pnand %p222, %p223
      %p225 = pneg %p224
      // Predicated region
      $region41: #{tpu_custom_call.1} parent=5 // pred_check
        _
      $region42: #{tpu_custom_call.1} parent=5 // pred_check_branch
        %227 = sbr.rel (%p224) target = $region44
      $region43: #{tpu_custom_call.1} parent=5 // pred_region
        %s228 = ssub.s32 %s15, 1
        %p229 = scmp.lt.s32.totalorder %s20, 1
        %s230 = scalar_select %p229, %s20, 1
        %s231 = smul.addr %s230, 8
        %s232 = scalar_lea.vmem %s0, %s231
        %p233 = pneg %p41
        %p234 = pneg %p38
        %p235 = scmp.lt.s32.totalorder %s20, 1
        %s236 = scalar_select %p235, %s20, 1
        %s237 = smul.addr %s236, 8
        %s238 = scalar_lea.vmem %s1, %s237
        %p239 = pneg %p67
        %p240 = pneg %p64
        %p241 = pneg %p88
        %p242 = pneg %p85
        %p243 = pneg %p109
        %p244 = pneg %p106
        %p245 = pneg %p130
        %p246 = pneg %p127
        %p247 = pneg %p151
        %p248 = pneg %p148
        %p249 = pneg %p177
        %p250 = pneg %p174
        %s251 = sand.u32 %s164, 1
        %s252 = scalar_lea.sflag [#allocation3], %s251
        %s253 = sand.u32 %s164, 1
        %s254 = smul.addr %s253, 8
        %s255 = scalar_lea.vmem [#allocation2], %s254
        %p256 = scmp.lt.s32.totalorder %s20, 1
        %s257 = scalar_select %p256, %s20, 1
        %s258 = smul.addr %s257, 8
        %s259 = scalar_lea.vmem %s0, %s258
        %p260 = scmp.lt.s32.totalorder %s20, 1
        %s261 = scalar_select %p260, %s20, 1
        %s262 = smul.addr %s261, 8
        %s263 = scalar_lea.vmem %s1, %s262
        %v264 = vld [vmem:[%s259] sm:$0xff]
        %v265 = vld [vmem:[%s2] sm:$0xff]
        %v266 = vld [vmem:[%s2 + $0x8] sm:$0xff]
        %v267 = vld [vmem:[%s2 + $0x10] sm:$0xff]
        %v268 = vld [vmem:[%s2 + $0x18] sm:$0xff]
        %v269 = vld [vmem:[%s2 + $0x20] sm:$0xff]
        %v270 = vld [vmem:[%s2 + $0x28] sm:$0xff]
        %v271 = vld [vmem:[%s2 + $0x30] sm:$0xff]
        %v272 = vld [vmem:[%s2 + $0x38] sm:$0xff]
        %v273 = vld [vmem:[%s3] sm:$0x1]
        %v275 = vlaneseq
        %v276 = vshrl.u32 %v275, 7
        %v277 = vsub.s32 0, %v276
        %v278 = vrot.slane %v273, %v277
        %vm280 = vcmask 523264
        %v282 = vsel %vm280, %v264, 0
        %284 = vmatprep.subr.mxu0 0.0
        %285 = vmatpush1.msra.mxu0 %v265
        %286 = vmatprep.subr.mxu0 0.0
        %287 = vmatpush1.msra.mxu0 %v266
        %288 = vmatprep.subr.mxu0 0.0
        %289 = vmatpush1.msra.mxu0 %v267
        %290 = vmatprep.subr.mxu0 0.0
        %291 = vmatpush1.msra.mxu0 %v268
        %292 = vmatprep.subr.mxu0 0.0
        %293 = vmatpush1.msra.mxu0 %v269
        %294 = vmatprep.subr.mxu0 0.0
        %295 = vmatpush1.msra.mxu0 %v270
        %296 = vmatprep.subr.mxu0 0.0
        %297 = vmatpush1.msra.mxu0 %v271
        %298 = vmatprep.subr.mxu0 0.0
        %299 = vmatpush1.msra.mxu0 %v272
        %300 = vmatprep.subr.mxu0 0.0
        %301 = vmatpush1.msra.mxu0 0.0
        %302 = vmatprep.subr.mxu0 0.0
        %303 = vmatpush1.msra.mxu0 0.0
        %304 = vmatprep.subr.mxu0 0.0
        %305 = vmatpush1.msra.mxu0 0.0
        %306 = vmatprep.subr.mxu0 0.0
        %307 = vmatpush1.msra.mxu0 0.0
        %308 = vmatprep.subr.mxu0 0.0
        %309 = vmatpush1.msra.mxu0 0.0
        %310 = vmatprep.subr.mxu0 0.0
        %311 = vmatpush1.msra.mxu0 0.0
        %312 = vmatprep.subr.mxu0 0.0
        %313 = vmatpush1.msra.mxu0 0.0
        %314 = vmatprep.subr.mxu0 0.0
        %315 = vmatpush1.msra.mxu0 0.0
        %316 = vmatprep.subr.mxu0 0.0
        %317 = vmatpush1.msra.mxu0 0.0
        %318 = vmatprep.subr.mxu0 0.0
        %319 = vmatpush1.msra.mxu0 0.0
        %320 = vmatprep.subr.mxu0 0.0
        %321 = vmatpush1.msra.mxu0 0.0
        %322 = vmatprep.subr.mxu0 0.0
        %323 = vmatpush1.msra.mxu0 0.0
        %324 = vmatprep.subr.mxu0 0.0
        %325 = vmatpush1.msra.mxu0 0.0
        %326 = vmatprep.subr.mxu0 0.0
        %327 = vmatpush1.msra.mxu0 0.0
        %328 = vmatprep.subr.mxu0 0.0
        %329 = vmatpush1.msra.mxu0 0.0
        %330 = vmatprep.subr.mxu0 0.0
        %331 = vmatpush1.msra.mxu0 0.0
        %332 = vmatprep.subr.mxu0 0.0
        %333 = vmatpush1.msra.mxu0 0.0
        %334 = vmatprep.subr.mxu0 0.0
        %335 = vmatpush1.msra.mxu0 0.0
        %336 = vmatprep.subr.mxu0 0.0
        %337 = vmatpush1.msra.mxu0 0.0
        %338 = vmatprep.subr.mxu0 0.0
        %339 = vmatpush1.msra.mxu0 0.0
        %340 = vmatprep.subr.mxu0 0.0
        %341 = vmatpush1.msra.mxu0 0.0
        %342 = vmatprep.subr.mxu0 0.0
        %343 = vmatpush1.msra.mxu0 0.0
        %344 = vmatprep.subr.mxu0 0.0
        %345 = vmatpush1.msra.mxu0 0.0
        %346 = vmatprep.subr.mxu0 0.0
        %347 = vmatpush1.msra.mxu0 0.0
        %348 = vmatprep.mubr.f32.mxu0 0.0
        %349 = vmatmul.mubr.f32.gmra.mrb[0].mxu0 %v282
        %v350 = vpop.f32.mrb[0].mxu0
        %v351 = vadd.f32 %v278, %v350
        %v352 = vpop.f32.mrb[0].mxu0
        %353 = vdwg.mxu0
        %v354 = vld [vmem:[%s263] sm:$0xff]
        %v355 = vadd.f32 %v351, %v354
        %v356 = vld [vmem:[%s4] sm:$0x1]
        %v357 = vld [vmem:[%s5] sm:$0x1]
        %vm358 = vcmask 261120
        %v359 = vsel %vm358, %v355, 0.0
        %360 = vadd.xlane.f32.xlu0 %v359
        %v361 = vpop.xlane.xlu0 %360
        %v362 = vmul.f32 %v355, %v355
        %v363 = vsel %vm358, %v362, 0.0
        %364 = vadd.xlane.f32.xlu0 %v363
        %v365 = vpop.xlane.xlu0 %364
        %v366 = vmul.f32 %v361, 0.03125
        %v367 = vmul.f32 %v365, 0.03125
        %v368 = vmul.f32 %v366, %v366
        %v369 = vsub.f32 %v367, %v368
        %v370 = vmax.f32 %v369, 0.0
        %v371 = vadd.f32 %v370, 1e-12
        %v372 = vrsqrt.pop %v371
        %v373 = vsub.f32 %v355, %v366
        %v374 = vmul.f32 %v373, %v372
        %v376 = vlaneseq
        %v377 = vshrl.u32 %v376, 7
        %v378 = vsub.s32 0, %v377
        %v379 = vrot.slane %v356, %v378
        %v381 = vmul.f32 %v374, %v379
        %v383 = vlaneseq
        %v384 = vshrl.u32 %v383, 7
        %v385 = vsub.s32 0, %v384
        %v386 = vrot.slane %v357, %v385
        %v388 = vadd.f32 %v381, %v386
        %389 = vst.msk [vmem:[%s255] sm:$0xff] %vm358, %v388
        %s390 = sand.u32 %s164, 1
        %s391 = scalar_lea.sflag [#allocation3], %s390
        %s392 = sand.u32 %s164, 1
        %s393 = smul.addr %s392, 8
        %s394 = scalar_lea.vmem [#allocation2], %s393
        // Predicated region
        $region45: #{tpu_custom_call.1} parent=43 // pred_check
          %p395 = pneg %p174
        $region46: #{tpu_custom_call.1} parent=43 // pred_check_branch
          %397 = sbr.rel (%p395) target = $region48
        $region47: #{tpu_custom_call.1} parent=43 // pred_region
          %s399 = ssub.s32 128, 128
          %400 = vsyncadd %s391, %s399
          %s401 = smul.addr %s20, 128
          %s402 = scalar_lea.hbm %s6, %s401
          %s404 = sshll.u32 %s394, 4
          %s405 = int_to_ptr.vmem [resolvable:$true] %s404
          %407 = dma.vmem_to_hbm [thread:$0]  %s405, 128, %s402, %s391
        $region48: #{tpu_custom_call.1} parent=43 // pred_fallthru
          _
      $region44: #{tpu_custom_call.1} parent=5 // pred_fallthru
        _
      %p408 = scmp.le.s32.totalorder 2, %s15
      // Predicated region
      $region49: #{tpu_custom_call.1} parent=5 // pred_check
        %p409 = pneg %p408
      $region50: #{tpu_custom_call.1} parent=5 // pred_check_branch
        %411 = sbr.rel (%p409) target = $region52
      $region51: #{tpu_custom_call.1} parent=5 // pred_region
        %s412 = ssub.s32 %s15, 2
        // Predicated region
        $region53: #{tpu_custom_call.1} parent=51 // pred_check
          %p413 = pneg %p180
        $region54: #{tpu_custom_call.1} parent=51 // pred_check_branch
          %415 = sbr.rel (%p413) target = $region56
        $region55: #{tpu_custom_call.1} parent=51 // pred_region
          %s416 = sand.u32 %s165, 1
          %s417 = scalar_lea.sflag [#allocation3], %s416
          %s418 = sand.u32 %s165, 1
          %s419 = smul.addr %s418, 8
          %s420 = scalar_lea.vmem [#allocation2], %s419
          %421 = dma.done %s417, 128
        $region56: #{tpu_custom_call.1} parent=51 // pred_fallthru
          _
      $region52: #{tpu_custom_call.1} parent=5 // pred_fallthru
        _
    $region6: #{tpu_custom_call.1} parent=1 // loop_footer
      %s19 = sadd.s32 1, %s15
    $region7: #{tpu_custom_call.1} parent=1 // loop_footer_branch
      %14 = sbr.rel target = $region3
    $region8: #{tpu_custom_call.1} parent=1 // loop_exit
      _
    %422 = vsyncpa [#allocation3], 1
    %s423 = scalar_lea.sflag [#allocation3], 1
    %424 = vsyncpa %s423, 1

</llo_original>
